<compile_context>
chip_gen: v7x
topology: tpu7x:2x2x1
jax: 0.10.0
libtpu: 0.0.40
codegen_flags: <defaults>
</compile_context>

<pallas_src>
import functools

import jax
import jax.numpy as jnp
from jax.experimental import pallas as pl
from jax.experimental.pallas import tpu as pltpu


def _bottleneck_kernel(x_ref, w1_ref, w2_ref, w3_ref, rc_ref,
                       b1_ref, b2_ref, b3_ref, o_ref,
                       *, img_h, img_w, batch_block):
    # x_ref : (BB, Cin, HW)      matmul dtype (bf16 or f32)
    # w1_ref: (Cmid, Cin)        conv1 weight, BN1 scale folded in
    # w2_ref: (Cmid, 9*Cmid)     conv2 taps fused along K, BN2 scale folded in
    # w3_ref: (Cout, Cmid)       conv3 weight, BN3 scale folded in
    # rc_ref: (2, 1, HW) int32   row / col index of every flattened pixel
    # b*_ref: (C, 1) f32         folded BN shift
    # o_ref : (BB, Cout, HW)     f32 output
    hw = img_h * img_w

    # Weights / constants: constant index_map => VMEM-resident across grid steps.
    w1 = w1_ref[...]
    w2 = w2_ref[...]
    w3 = w3_ref[...]
    b1 = b1_ref[...]
    b2 = b2_ref[...]
    b3 = b3_ref[...]
    row = rc_ref[0]                      # (1, HW) int32
    col = rc_ref[1]                      # (1, HW) int32

    # Border masks for the 8 non-center taps, built in-kernel (cheap compares).
    taps = []
    for k in range(9):
        dy, dx = k // 3 - 1, k % 3 - 1
        if dy == 0 and dx == 0:
            taps.append((0, None))       # center tap: no shift, all-ones mask skipped
        else:
            valid = ((row + dy >= 0) & (row + dy < img_h) &
                     (col + dx >= 0) & (col + dx < img_w))
            taps.append((dy * img_w + dx, valid.astype(jnp.float32)))

    for b in range(batch_block):         # static unroll over the batch block
        x = x_ref[b]                                           # (Cin, HW)

        # --- conv1 (1x1) + bn1 shift + relu --------------------------------
        h1 = jnp.dot(w1, x, preferred_element_type=jnp.float32)
        h1 = jnp.maximum(h1 + b1, 0.0)                         # (Cmid, HW) f32

        # --- conv2 (3x3, stride 1, pad 1) + bn2 shift + relu ---------------
        # Build the (9*Cmid, HW) stack of shifted+masked planes, then one matmul.
        planes = []
        for shift, mask in taps:
            if shift == 0:
                planes.append(h1)
            else:
                # pltpu.roll matches jnp.roll: out[p] = in[(p - shift) mod hw].
                # We need plane[:, p] = h1[:, p + shift]  =>  roll by (-shift) mod hw;
                # wrapped positions are zeroed by the border mask.
                rolled = pltpu.roll(h1, shift=(-shift) % hw, axis=1)
                planes.append(rolled * mask)
        stacked = jnp.concatenate(planes, axis=0).astype(x.dtype)   # (9*Cmid, HW)
        h2 = jnp.dot(w2, stacked, preferred_element_type=jnp.float32)
        h2 = jnp.maximum(h2 + b2, 0.0).astype(x.dtype)              # (Cmid, HW)

        # --- conv3 (1x1) + bn3 shift + relu --------------------------------
        h3 = jnp.dot(w3, h2, preferred_element_type=jnp.float32)
        h3 = jnp.maximum(h3 + b3, 0.0)                              # (Cout, HW) f32

        # --- identity shortcut + final relu (f32 elementwise) --------------
        o_ref[b] = jnp.maximum(h3 + x.astype(jnp.float32), 0.0).astype(o_ref.dtype)


def _round_up(v, m):
    return -(-v // m) * m


def deconv_bottleneck_forward(x, w1, w2, w3, bn1, bn2, bn3, *,
                              stride=1, upsample=None,
                              matmul_dtype=jnp.bfloat16,
                              batch_block=None):
    """DeconvBottleneck forward (stride=1 / identity shortcut, eval-mode BN).

    x  : (N, Cin, H, W) float32
    w1 : (Cmid, Cin)          conv1 1x1 weight (no bias)
    w2 : (Cmid, Cmid, 3, 3)   conv2 3x3 weight (no bias)
    w3 : (Cout, Cmid)         conv3 1x1 weight (no bias), Cout = Cmid * expansion
    bn*: (2, C, 1)            folded eval-mode BatchNorm (scale, shift) per channel
    matmul_dtype : dtype used for the MXU matmuls (bf16 fast path or f32 exact).
    """
    if stride != 1 or upsample is not None:
        # TODO(synk): ConvTranspose2d (stride>1, output_padding=1) branch and the
        # user-supplied `upsample` shortcut module are not implemented in Pallas.
        raise NotImplementedError("only the stride=1 / identity-shortcut path is implemented")
    # TODO(synk): training-mode BatchNorm (batch statistics) is not implemented;
    # BN here is eval-mode, folded into per-channel scale/shift.

    n, cin, h, w = x.shape
    cmid = w1.shape[0]
    cout = w3.shape[0]
    assert cout == cin, "identity shortcut requires in_channels == out_channels * expansion"
    hw = h * w
    out_dtype = x.dtype
    mm_dtype = jnp.dtype(matmul_dtype)

    # ---- fold eval-mode BN scale into the conv weights (only shift stays in-kernel)
    w1s = w1 * bn1[0]                              # (Cmid,1) * (Cmid,Cin)
    w2s = w2 * bn2[0][:, :, None, None]            # (Cmid,1,1,1) * (Cmid,Cmid,3,3)
    w3s = w3 * bn3[0]                              # (Cout,1) * (Cout,Cmid)
    b1v, b2v, b3v = bn1[1], bn2[1], bn3[1]         # (C, 1) shifts, stay f32

    # ---- pad channel counts to sublane/MXU-friendly multiples; pads are zero.
    cpad = 16 if mm_dtype.itemsize == 2 else 8
    cin_p = _round_up(cin, cpad)
    cmid_p = _round_up(cmid, cpad)
    cout_p = _round_up(cout, cpad)

    w1p = jnp.zeros((cmid_p, cin_p), jnp.float32).at[:cmid, :cin].set(w1s)
    w2p = jnp.zeros((cmid_p, cmid_p, 3, 3), jnp.float32).at[:cmid, :cmid].set(w2s)
    w3p = jnp.zeros((cout_p, cmid_p), jnp.float32).at[:cout, :cmid].set(w3s)
    b1p = jnp.zeros((cmid_p, 1), jnp.float32).at[:cmid].set(b1v)
    b2p = jnp.zeros((cmid_p, 1), jnp.float32).at[:cmid].set(b2v)
    b3p = jnp.zeros((cout_p, 1), jnp.float32).at[:cout].set(b3v)

    # conv2 taps fused along K: w2f[o, k*Cmid + i] = w2[o, i, ky, kx], k = ky*3 + kx.
    w2f = jnp.transpose(w2p, (0, 2, 3, 1)).reshape(cmid_p, 9 * cmid_p)

    # NC(HW) layout: spatial stays on lanes; no wrapper transposes, only free reshapes.
    x_flat = x.reshape(n, cin, hw)
    if cin_p != cin:
        x_flat = jnp.pad(x_flat, ((0, 0), (0, cin_p - cin), (0, 0)))
    x_mm = x_flat.astype(mm_dtype)
    w1m, w2m, w3m = (a.astype(mm_dtype) for a in (w1p, w2f, w3p))

    # Tiny row/col index table for in-kernel border-mask generation.
    pos = jnp.arange(hw, dtype=jnp.int32)
    rc = jnp.stack([pos // w, pos % w]).reshape(2, 1, hw)

    # Batch block: amortize per-grid-step overhead over several images when C*HW is
    # small, while keeping the per-step VMEM footprint modest.
    if batch_block is None:
        per_img = hw * 4 * (cin_p + cout_p + 13 * cmid_p)   # rough live f32 bytes
        cap = int(max(1, min(8, (4 << 20) // max(per_img, 1))))
        batch_block = 1
        for d in range(1, n + 1):
            if n % d == 0 and d <= cap:
                batch_block = d
    assert n % batch_block == 0, "batch_block must divide the batch size"

    kernel = functools.partial(_bottleneck_kernel, img_h=h, img_w=w,
                               batch_block=batch_block)

    flops = 2 * n * hw * (cmid_p * cin_p + 9 * cmid_p * cmid_p + cout_p * cmid_p)
    bytes_accessed = (n * hw * (cin_p * mm_dtype.itemsize
                                + cout_p * jnp.dtype(out_dtype).itemsize)
                      + (cmid_p * cin_p + 9 * cmid_p * cmid_p + cout_p * cmid_p)
                      * mm_dtype.itemsize
                      + (2 * cmid_p + cout_p) * 4 + 2 * hw * 4)

    out_p = pl.pallas_call(
        kernel,
        out_shape=jax.ShapeDtypeStruct((n, cout_p, hw), out_dtype),
        grid_spec=pltpu.PrefetchScalarGridSpec(
            num_scalar_prefetch=0,
            grid=(n // batch_block,),
            in_specs=[
                pl.BlockSpec((batch_block, cin_p, hw), lambda i: (i, 0, 0)),   # x
                pl.BlockSpec((cmid_p, cin_p), lambda i: (0, 0)),               # w1
                pl.BlockSpec((cmid_p, 9 * cmid_p), lambda i: (0, 0)),          # w2 fused
                pl.BlockSpec((cout_p, cmid_p), lambda i: (0, 0)),              # w3
                pl.BlockSpec((2, 1, hw), lambda i: (0, 0, 0)),                 # row/col idx
                pl.BlockSpec((cmid_p, 1), lambda i: (0, 0)),                   # bn1 shift
                pl.BlockSpec((cmid_p, 1), lambda i: (0, 0)),                   # bn2 shift
                pl.BlockSpec((cout_p, 1), lambda i: (0, 0)),                   # bn3 shift
            ],
            out_specs=pl.BlockSpec((batch_block, cout_p, hw), lambda i: (i, 0, 0)),
        ),
        compiler_params=pltpu.CompilerParams(
            dimension_semantics=("parallel",),
            vmem_limit_bytes=32 * 1024 * 1024,
        ),
        cost_estimate=pl.CostEstimate(flops=int(flops), transcendentals=0,
                                      bytes_accessed=int(bytes_accessed)),
    )(x_mm, w1m, w2m, w3m, rc, b1p, b2p, b3p)

    if cout_p != cout:
        out_p = out_p[:, :cout, :]
    return out_p.reshape(n, cout, h, w)


# ----------------------------- reference & test ------------------------------

def _ref_forward(x, w1, w2, w3, bn1, bn2, bn3):
    """Plain-JAX reference identical to the PyTorch forward (eval-mode BN)."""
    def conv(hh, wgt, pad):
        return jax.lax.conv_general_dilated(
            hh, wgt, window_strides=(1, 1), padding=pad,
            dimension_numbers=("NCHW", "OIHW", "NCHW"))

    def bn_relu(hh, p):
        return jnp.maximum(hh * p[0][None, :, :, None] + p[1][None, :, :, None], 0.0)

    hh = bn_relu(conv(x, w1[:, :, None, None], "VALID"), bn1)
    hh = bn_relu(conv(hh, w2, ((1, 1), (1, 1))), bn2)
    hh = bn_relu(conv(hh, w3[:, :, None, None], "VALID"), bn3)
    return jnp.maximum(hh + x, 0.0)


if __name__ == "__main__":
    key = jax.random.PRNGKey(0)

    def fold_bn(k, c):
        kg, kb, km, kv = jax.random.split(k, 4)
        gamma = 1.0 + 0.1 * jax.random.normal(kg, (c,), dtype=jnp.float32)
        beta = 0.1 * jax.random.normal(kb, (c,), dtype=jnp.float32)
        mean = 0.1 * jax.random.normal(km, (c,), dtype=jnp.float32)
        var = jax.random.uniform(kv, (c,), dtype=jnp.float32, minval=0.5, maxval=1.5)
        scale = gamma * jax.lax.rsqrt(var + 1e-5)
        shift = beta - mean * scale
        return jnp.stack([scale, shift]).reshape(2, c, 1)

    def make_case(k, batch, in_ch, out_ch, expansion, H, W):
        ks = jax.random.split(k, 7)
        cmid = out_ch
        cout = out_ch * expansion
        assert cout == in_ch
        xx = jax.random.normal(ks[0], (batch, in_ch, H, W), dtype=jnp.float32)
        w1 = 0.3 * jax.random.normal(ks[1], (cmid, in_ch), dtype=jnp.float32)
        w2 = 0.3 * jax.random.normal(ks[2], (cmid, cmid, 3, 3), dtype=jnp.float32)
        w3 = 0.3 * jax.random.normal(ks[3], (cout, cmid), dtype=jnp.float32)
        return xx, (w1, w2, w3, fold_bn(ks[4], cmid), fold_bn(ks[5], cmid),
                    fold_bn(ks[6], cout))

    cases = [
        # (batch, in_ch, out_ch, expansion, H, W, batch_block)
        (2, 8, 4, 2, 16, 16, None),   # square image, batch-blocked single grid step
        (3, 16, 8, 2, 16, 24, 1),     # non-square image (H != W), multi-step grid
    ]
    for idx, (batch, in_ch, out_ch, expansion, H, W, bb) in enumerate(cases):
        k = jax.random.fold_in(key, idx)
        xx, params = make_case(k, batch, in_ch, out_ch, expansion, H, W)
        ref = _ref_forward(xx, *params)

        # Exact-semantics check: f32 matmuls.
        out32 = deconv_bottleneck_forward(xx, *params, matmul_dtype=jnp.float32,
                                          batch_block=bb)
        jax.block_until_ready(out32)
        assert out32.shape == ref.shape
        assert jnp.allclose(out32, ref, atol=1e-4, rtol=1e-4), (
            f"[case {idx}] f32 max abs err {jnp.max(jnp.abs(out32 - ref))}")

        # Fast path: bf16 matmul inputs, f32 accumulation / elementwise math.
        outbf = deconv_bottleneck_forward(xx, *params, matmul_dtype=jnp.bfloat16,
                                          batch_block=bb)
        jax.block_until_ready(outbf)
        err = jnp.max(jnp.abs(outbf - ref))
        tol = 4e-2 * (1.0 + jnp.max(jnp.abs(ref)))
        assert err <= tol, f"[case {idx}] bf16 max abs err {err} > tol {tol}"

    print("KERNEL_OK")
</pallas_src>

<mosaic_0001>
module attributes {stable_mosaic.version = 11 : i64} {
  func.func @_bottleneck_kernel(%arg0: i32, %arg1: memref<2x8x256xf32, #tpu.memory_space<vmem>>, %arg2: memref<8x8xf32, #tpu.memory_space<vmem>>, %arg3: memref<8x72xf32, #tpu.memory_space<vmem>>, %arg4: memref<8x8xf32, #tpu.memory_space<vmem>>, %arg5: memref<2x1x256xi32, #tpu.memory_space<vmem>>, %arg6: memref<8x1xf32, #tpu.memory_space<vmem>>, %arg7: memref<8x1xf32, #tpu.memory_space<vmem>>, %arg8: memref<8x1xf32, #tpu.memory_space<vmem>>, %arg9: memref<2x8x256xf32, #tpu.memory_space<vmem>>) attributes {dimension_semantics = [#tpu.dimension_semantics<parallel>], iteration_bounds = array<i64: 1>, scalar_prefetch = 0 : i64, scratch_operands = 0 : i64, tpu.core_type = #tpu.core_type<tc>, window_params = [{transform_indices = @transform_0, window_bounds = array<i64: 2, 8, 256>}, {pipeline_mode = #tpu.pipeline_mode<synchronous>, transform_indices = @transform_1, window_bounds = array<i64: 8, 8>}, {pipeline_mode = #tpu.pipeline_mode<synchronous>, transform_indices = @transform_2, window_bounds = array<i64: 8, 72>}, {pipeline_mode = #tpu.pipeline_mode<synchronous>, transform_indices = @transform_3, window_bounds = array<i64: 8, 8>}, {pipeline_mode = #tpu.pipeline_mode<synchronous>, transform_indices = @transform_4, window_bounds = array<i64: 2, 1, 256>}, {pipeline_mode = #tpu.pipeline_mode<synchronous>, transform_indices = @transform_5, window_bounds = array<i64: 8, 1>}, {pipeline_mode = #tpu.pipeline_mode<synchronous>, transform_indices = @transform_6, window_bounds = array<i64: 8, 1>}, {pipeline_mode = #tpu.pipeline_mode<synchronous>, transform_indices = @transform_7, window_bounds = array<i64: 8, 1>}, {transform_indices = @transform_8, window_bounds = array<i64: 2, 8, 256>}]} {
    %c0 = arith.constant 0 : index
    %c0_0 = arith.constant 0 : index
    %0 = vector.load %arg2[%c0, %c0_0] : memref<8x8xf32, #tpu.memory_space<vmem>>, vector<8x8xf32>
    %c0_1 = arith.constant 0 : index
    %c0_2 = arith.constant 0 : index
    %1 = vector.load %arg3[%c0_1, %c0_2] : memref<8x72xf32, #tpu.memory_space<vmem>>, vector<8x72xf32>
    %c0_3 = arith.constant 0 : index
    %c0_4 = arith.constant 0 : index
    %2 = vector.load %arg4[%c0_3, %c0_4] : memref<8x8xf32, #tpu.memory_space<vmem>>, vector<8x8xf32>
    %c0_5 = arith.constant 0 : index
    %c0_6 = arith.constant 0 : index
    %3 = vector.load %arg6[%c0_5, %c0_6] : memref<8x1xf32, #tpu.memory_space<vmem>>, vector<8x1xf32>
    %c0_7 = arith.constant 0 : index
    %c0_8 = arith.constant 0 : index
    %4 = vector.load %arg7[%c0_7, %c0_8] : memref<8x1xf32, #tpu.memory_space<vmem>>, vector<8x1xf32>
    %c0_9 = arith.constant 0 : index
    %c0_10 = arith.constant 0 : index
    %5 = vector.load %arg8[%c0_9, %c0_10] : memref<8x1xf32, #tpu.memory_space<vmem>>, vector<8x1xf32>
    %c0_11 = arith.constant 0 : index
    %c0_12 = arith.constant 0 : index
    %c0_13 = arith.constant 0 : index
    %6 = vector.load %arg5[%c0_11, %c0_12, %c0_13] : memref<2x1x256xi32, #tpu.memory_space<vmem>>, vector<1x1x256xi32>
    %7 = vector.shape_cast %6 : vector<1x1x256xi32> to vector<1x256xi32>
    %c1 = arith.constant 1 : index
    %c0_14 = arith.constant 0 : index
    %c0_15 = arith.constant 0 : index
    %8 = vector.load %arg5[%c1, %c0_14, %c0_15] : memref<2x1x256xi32, #tpu.memory_space<vmem>>, vector<1x1x256xi32>
    %9 = vector.shape_cast %8 : vector<1x1x256xi32> to vector<1x256xi32>
    %c-1_i32 = arith.constant -1 : i32
    %10 = vector.broadcast %c-1_i32 : i32 to vector<1x256xi32>
    %11 = arith.addi %7, %10 : vector<1x256xi32>
    %c0_i32 = arith.constant 0 : i32
    %12 = vector.broadcast %c0_i32 : i32 to vector<1x256xi32>
    %13 = arith.cmpi sge, %11, %12 : vector<1x256xi32>
    %c-1_i32_16 = arith.constant -1 : i32
    %14 = vector.broadcast %c-1_i32_16 : i32 to vector<1x256xi32>
    %15 = arith.addi %7, %14 : vector<1x256xi32>
    %c16_i32 = arith.constant 16 : i32
    %16 = vector.broadcast %c16_i32 : i32 to vector<1x256xi32>
    %17 = arith.cmpi slt, %15, %16 : vector<1x256xi32>
    %18 = arith.andi %13, %17 : vector<1x256xi1>
    %c-1_i32_17 = arith.constant -1 : i32
    %19 = vector.broadcast %c-1_i32_17 : i32 to vector<1x256xi32>
    %20 = arith.addi %9, %19 : vector<1x256xi32>
    %c0_i32_18 = arith.constant 0 : i32
    %21 = vector.broadcast %c0_i32_18 : i32 to vector<1x256xi32>
    %22 = arith.cmpi sge, %20, %21 : vector<1x256xi32>
    %23 = arith.andi %18, %22 : vector<1x256xi1>
    %c-1_i32_19 = arith.constant -1 : i32
    %24 = vector.broadcast %c-1_i32_19 : i32 to vector<1x256xi32>
    %25 = arith.addi %9, %24 : vector<1x256xi32>
    %c16_i32_20 = arith.constant 16 : i32
    %26 = vector.broadcast %c16_i32_20 : i32 to vector<1x256xi32>
    %27 = arith.cmpi slt, %25, %26 : vector<1x256xi32>
    %28 = arith.andi %23, %27 : vector<1x256xi1>
    %29 = arith.extui %28 : vector<1x256xi1> to vector<1x256xi32>
    %30 = arith.sitofp %29 : vector<1x256xi32> to vector<1x256xf32>
    %c-1_i32_21 = arith.constant -1 : i32
    %31 = vector.broadcast %c-1_i32_21 : i32 to vector<1x256xi32>
    %32 = arith.addi %7, %31 : vector<1x256xi32>
    %c0_i32_22 = arith.constant 0 : i32
    %33 = vector.broadcast %c0_i32_22 : i32 to vector<1x256xi32>
    %34 = arith.cmpi sge, %32, %33 : vector<1x256xi32>
    %c-1_i32_23 = arith.constant -1 : i32
    %35 = vector.broadcast %c-1_i32_23 : i32 to vector<1x256xi32>
    %36 = arith.addi %7, %35 : vector<1x256xi32>
    %c16_i32_24 = arith.constant 16 : i32
    %37 = vector.broadcast %c16_i32_24 : i32 to vector<1x256xi32>
    %38 = arith.cmpi slt, %36, %37 : vector<1x256xi32>
    %39 = arith.andi %34, %38 : vector<1x256xi1>
    %c0_i32_25 = arith.constant 0 : i32
    %40 = vector.broadcast %c0_i32_25 : i32 to vector<1x256xi32>
    %41 = arith.addi %9, %40 : vector<1x256xi32>
    %c0_i32_26 = arith.constant 0 : i32
    %42 = vector.broadcast %c0_i32_26 : i32 to vector<1x256xi32>
    %43 = arith.cmpi sge, %41, %42 : vector<1x256xi32>
    %44 = arith.andi %39, %43 : vector<1x256xi1>
    %c0_i32_27 = arith.constant 0 : i32
    %45 = vector.broadcast %c0_i32_27 : i32 to vector<1x256xi32>
    %46 = arith.addi %9, %45 : vector<1x256xi32>
    %c16_i32_28 = arith.constant 16 : i32
    %47 = vector.broadcast %c16_i32_28 : i32 to vector<1x256xi32>
    %48 = arith.cmpi slt, %46, %47 : vector<1x256xi32>
    %49 = arith.andi %44, %48 : vector<1x256xi1>
    %50 = arith.extui %49 : vector<1x256xi1> to vector<1x256xi32>
    %51 = arith.sitofp %50 : vector<1x256xi32> to vector<1x256xf32>
    %c-1_i32_29 = arith.constant -1 : i32
    %52 = vector.broadcast %c-1_i32_29 : i32 to vector<1x256xi32>
    %53 = arith.addi %7, %52 : vector<1x256xi32>
    %c0_i32_30 = arith.constant 0 : i32
    %54 = vector.broadcast %c0_i32_30 : i32 to vector<1x256xi32>
    %55 = arith.cmpi sge, %53, %54 : vector<1x256xi32>
    %c-1_i32_31 = arith.constant -1 : i32
    %56 = vector.broadcast %c-1_i32_31 : i32 to vector<1x256xi32>
    %57 = arith.addi %7, %56 : vector<1x256xi32>
    %c16_i32_32 = arith.constant 16 : i32
    %58 = vector.broadcast %c16_i32_32 : i32 to vector<1x256xi32>
    %59 = arith.cmpi slt, %57, %58 : vector<1x256xi32>
    %60 = arith.andi %55, %59 : vector<1x256xi1>
    %c1_i32 = arith.constant 1 : i32
    %61 = vector.broadcast %c1_i32 : i32 to vector<1x256xi32>
    %62 = arith.addi %9, %61 : vector<1x256xi32>
    %c0_i32_33 = arith.constant 0 : i32
    %63 = vector.broadcast %c0_i32_33 : i32 to vector<1x256xi32>
    %64 = arith.cmpi sge, %62, %63 : vector<1x256xi32>
    %65 = arith.andi %60, %64 : vector<1x256xi1>
    %c1_i32_34 = arith.constant 1 : i32
    %66 = vector.broadcast %c1_i32_34 : i32 to vector<1x256xi32>
    %67 = arith.addi %9, %66 : vector<1x256xi32>
    %c16_i32_35 = arith.constant 16 : i32
    %68 = vector.broadcast %c16_i32_35 : i32 to vector<1x256xi32>
    %69 = arith.cmpi slt, %67, %68 : vector<1x256xi32>
    %70 = arith.andi %65, %69 : vector<1x256xi1>
    %71 = arith.extui %70 : vector<1x256xi1> to vector<1x256xi32>
    %72 = arith.sitofp %71 : vector<1x256xi32> to vector<1x256xf32>
    %c0_i32_36 = arith.constant 0 : i32
    %73 = vector.broadcast %c0_i32_36 : i32 to vector<1x256xi32>
    %74 = arith.addi %7, %73 : vector<1x256xi32>
    %c0_i32_37 = arith.constant 0 : i32
    %75 = vector.broadcast %c0_i32_37 : i32 to vector<1x256xi32>
    %76 = arith.cmpi sge, %74, %75 : vector<1x256xi32>
    %c0_i32_38 = arith.constant 0 : i32
    %77 = vector.broadcast %c0_i32_38 : i32 to vector<1x256xi32>
    %78 = arith.addi %7, %77 : vector<1x256xi32>
    %c16_i32_39 = arith.constant 16 : i32
    %79 = vector.broadcast %c16_i32_39 : i32 to vector<1x256xi32>
    %80 = arith.cmpi slt, %78, %79 : vector<1x256xi32>
    %81 = arith.andi %76, %80 : vector<1x256xi1>
    %c-1_i32_40 = arith.constant -1 : i32
    %82 = vector.broadcast %c-1_i32_40 : i32 to vector<1x256xi32>
    %83 = arith.addi %9, %82 : vector<1x256xi32>
    %c0_i32_41 = arith.constant 0 : i32
    %84 = vector.broadcast %c0_i32_41 : i32 to vector<1x256xi32>
    %85 = arith.cmpi sge, %83, %84 : vector<1x256xi32>
    %86 = arith.andi %81, %85 : vector<1x256xi1>
    %c-1_i32_42 = arith.constant -1 : i32
    %87 = vector.broadcast %c-1_i32_42 : i32 to vector<1x256xi32>
    %88 = arith.addi %9, %87 : vector<1x256xi32>
    %c16_i32_43 = arith.constant 16 : i32
    %89 = vector.broadcast %c16_i32_43 : i32 to vector<1x256xi32>
    %90 = arith.cmpi slt, %88, %89 : vector<1x256xi32>
    %91 = arith.andi %86, %90 : vector<1x256xi1>
    %92 = arith.extui %91 : vector<1x256xi1> to vector<1x256xi32>
    %93 = arith.sitofp %92 : vector<1x256xi32> to vector<1x256xf32>
    %c0_i32_44 = arith.constant 0 : i32
    %94 = vector.broadcast %c0_i32_44 : i32 to vector<1x256xi32>
    %95 = arith.addi %7, %94 : vector<1x256xi32>
    %c0_i32_45 = arith.constant 0 : i32
    %96 = vector.broadcast %c0_i32_45 : i32 to vector<1x256xi32>
    %97 = arith.cmpi sge, %95, %96 : vector<1x256xi32>
    %c0_i32_46 = arith.constant 0 : i32
    %98 = vector.broadcast %c0_i32_46 : i32 to vector<1x256xi32>
    %99 = arith.addi %7, %98 : vector<1x256xi32>
    %c16_i32_47 = arith.constant 16 : i32
    %100 = vector.broadcast %c16_i32_47 : i32 to vector<1x256xi32>
    %101 = arith.cmpi slt, %99, %100 : vector<1x256xi32>
    %102 = arith.andi %97, %101 : vector<1x256xi1>
    %c1_i32_48 = arith.constant 1 : i32
    %103 = vector.broadcast %c1_i32_48 : i32 to vector<1x256xi32>
    %104 = arith.addi %9, %103 : vector<1x256xi32>
    %c0_i32_49 = arith.constant 0 : i32
    %105 = vector.broadcast %c0_i32_49 : i32 to vector<1x256xi32>
    %106 = arith.cmpi sge, %104, %105 : vector<1x256xi32>
    %107 = arith.andi %102, %106 : vector<1x256xi1>
    %c1_i32_50 = arith.constant 1 : i32
    %108 = vector.broadcast %c1_i32_50 : i32 to vector<1x256xi32>
    %109 = arith.addi %9, %108 : vector<1x256xi32>
    %c16_i32_51 = arith.constant 16 : i32
    %110 = vector.broadcast %c16_i32_51 : i32 to vector<1x256xi32>
    %111 = arith.cmpi slt, %109, %110 : vector<1x256xi32>
    %112 = arith.andi %107, %111 : vector<1x256xi1>
    %113 = arith.extui %112 : vector<1x256xi1> to vector<1x256xi32>
    %114 = arith.sitofp %113 : vector<1x256xi32> to vector<1x256xf32>
    %c1_i32_52 = arith.constant 1 : i32
    %115 = vector.broadcast %c1_i32_52 : i32 to vector<1x256xi32>
    %116 = arith.addi %7, %115 : vector<1x256xi32>
    %c0_i32_53 = arith.constant 0 : i32
    %117 = vector.broadcast %c0_i32_53 : i32 to vector<1x256xi32>
    %118 = arith.cmpi sge, %116, %117 : vector<1x256xi32>
    %c1_i32_54 = arith.constant 1 : i32
    %119 = vector.broadcast %c1_i32_54 : i32 to vector<1x256xi32>
    %120 = arith.addi %7, %119 : vector<1x256xi32>
    %c16_i32_55 = arith.constant 16 : i32
    %121 = vector.broadcast %c16_i32_55 : i32 to vector<1x256xi32>
    %122 = arith.cmpi slt, %120, %121 : vector<1x256xi32>
    %123 = arith.andi %118, %122 : vector<1x256xi1>
    %c-1_i32_56 = arith.constant -1 : i32
    %124 = vector.broadcast %c-1_i32_56 : i32 to vector<1x256xi32>
    %125 = arith.addi %9, %124 : vector<1x256xi32>
    %c0_i32_57 = arith.constant 0 : i32
    %126 = vector.broadcast %c0_i32_57 : i32 to vector<1x256xi32>
    %127 = arith.cmpi sge, %125, %126 : vector<1x256xi32>
    %128 = arith.andi %123, %127 : vector<1x256xi1>
    %c-1_i32_58 = arith.constant -1 : i32
    %129 = vector.broadcast %c-1_i32_58 : i32 to vector<1x256xi32>
    %130 = arith.addi %9, %129 : vector<1x256xi32>
    %c16_i32_59 = arith.constant 16 : i32
    %131 = vector.broadcast %c16_i32_59 : i32 to vector<1x256xi32>
    %132 = arith.cmpi slt, %130, %131 : vector<1x256xi32>
    %133 = arith.andi %128, %132 : vector<1x256xi1>
    %134 = arith.extui %133 : vector<1x256xi1> to vector<1x256xi32>
    %135 = arith.sitofp %134 : vector<1x256xi32> to vector<1x256xf32>
    %c1_i32_60 = arith.constant 1 : i32
    %136 = vector.broadcast %c1_i32_60 : i32 to vector<1x256xi32>
    %137 = arith.addi %7, %136 : vector<1x256xi32>
    %c0_i32_61 = arith.constant 0 : i32
    %138 = vector.broadcast %c0_i32_61 : i32 to vector<1x256xi32>
    %139 = arith.cmpi sge, %137, %138 : vector<1x256xi32>
    %c1_i32_62 = arith.constant 1 : i32
    %140 = vector.broadcast %c1_i32_62 : i32 to vector<1x256xi32>
    %141 = arith.addi %7, %140 : vector<1x256xi32>
    %c16_i32_63 = arith.constant 16 : i32
    %142 = vector.broadcast %c16_i32_63 : i32 to vector<1x256xi32>
    %143 = arith.cmpi slt, %141, %142 : vector<1x256xi32>
    %144 = arith.andi %139, %143 : vector<1x256xi1>
    %c0_i32_64 = arith.constant 0 : i32
    %145 = vector.broadcast %c0_i32_64 : i32 to vector<1x256xi32>
    %146 = arith.addi %9, %145 : vector<1x256xi32>
    %c0_i32_65 = arith.constant 0 : i32
    %147 = vector.broadcast %c0_i32_65 : i32 to vector<1x256xi32>
    %148 = arith.cmpi sge, %146, %147 : vector<1x256xi32>
    %149 = arith.andi %144, %148 : vector<1x256xi1>
    %c0_i32_66 = arith.constant 0 : i32
    %150 = vector.broadcast %c0_i32_66 : i32 to vector<1x256xi32>
    %151 = arith.addi %9, %150 : vector<1x256xi32>
    %c16_i32_67 = arith.constant 16 : i32
    %152 = vector.broadcast %c16_i32_67 : i32 to vector<1x256xi32>
    %153 = arith.cmpi slt, %151, %152 : vector<1x256xi32>
    %154 = arith.andi %149, %153 : vector<1x256xi1>
    %155 = arith.extui %154 : vector<1x256xi1> to vector<1x256xi32>
    %156 = arith.sitofp %155 : vector<1x256xi32> to vector<1x256xf32>
    %c1_i32_68 = arith.constant 1 : i32
    %157 = vector.broadcast %c1_i32_68 : i32 to vector<1x256xi32>
    %158 = arith.addi %7, %157 : vector<1x256xi32>
    %c0_i32_69 = arith.constant 0 : i32
    %159 = vector.broadcast %c0_i32_69 : i32 to vector<1x256xi32>
    %160 = arith.cmpi sge, %158, %159 : vector<1x256xi32>
    %c1_i32_70 = arith.constant 1 : i32
    %161 = vector.broadcast %c1_i32_70 : i32 to vector<1x256xi32>
    %162 = arith.addi %7, %161 : vector<1x256xi32>
    %c16_i32_71 = arith.constant 16 : i32
    %163 = vector.broadcast %c16_i32_71 : i32 to vector<1x256xi32>
    %164 = arith.cmpi slt, %162, %163 : vector<1x256xi32>
    %165 = arith.andi %160, %164 : vector<1x256xi1>
    %c1_i32_72 = arith.constant 1 : i32
    %166 = vector.broadcast %c1_i32_72 : i32 to vector<1x256xi32>
    %167 = arith.addi %9, %166 : vector<1x256xi32>
    %c0_i32_73 = arith.constant 0 : i32
    %168 = vector.broadcast %c0_i32_73 : i32 to vector<1x256xi32>
    %169 = arith.cmpi sge, %167, %168 : vector<1x256xi32>
    %170 = arith.andi %165, %169 : vector<1x256xi1>
    %c1_i32_74 = arith.constant 1 : i32
    %171 = vector.broadcast %c1_i32_74 : i32 to vector<1x256xi32>
    %172 = arith.addi %9, %171 : vector<1x256xi32>
    %c16_i32_75 = arith.constant 16 : i32
    %173 = vector.broadcast %c16_i32_75 : i32 to vector<1x256xi32>
    %174 = arith.cmpi slt, %172, %173 : vector<1x256xi32>
    %175 = arith.andi %170, %174 : vector<1x256xi1>
    %176 = arith.extui %175 : vector<1x256xi1> to vector<1x256xi32>
    %177 = arith.sitofp %176 : vector<1x256xi32> to vector<1x256xf32>
    %c0_76 = arith.constant 0 : index
    %c0_77 = arith.constant 0 : index
    %c0_78 = arith.constant 0 : index
    %178 = vector.load %arg1[%c0_76, %c0_77, %c0_78] : memref<2x8x256xf32, #tpu.memory_space<vmem>>, vector<1x8x256xf32>
    %179 = vector.shape_cast %178 : vector<1x8x256xf32> to vector<8x256xf32>
    %cst = arith.constant dense<0.000000e+00> : vector<8x256xf32>
    %180 = tpu.matmul %0, %179, %cst {dimension_numbers = #tpu.dot_dimension_numbers<[1], [0], [0], [1], [0, 0, 1, 1], [], []>} : vector<8x8xf32>, vector<8x256xf32>, vector<8x256xf32> -> vector<8x256xf32>
    %181 = vector.broadcast %3 : vector<8x1xf32> to vector<8x256xf32>
    %182 = arith.addf %180, %181 : vector<8x256xf32>
    %cst_79 = arith.constant 0.000000e+00 : f32
    %183 = vector.broadcast %cst_79 : f32 to vector<8x256xf32>
    %184 = arith.maximumf %182, %183 : vector<8x256xf32>
    %c17_i32 = arith.constant 17 : i32
    %185 = tpu.dynamic_rotate %184 by %c17_i32 dim 1 : vector<8x256xf32>, i32 -> vector<8x256xf32>
    %186 = vector.broadcast %30 : vector<1x256xf32> to vector<8x256xf32>
    %187 = arith.mulf %185, %186 : vector<8x256xf32>
    %c16_i32_80 = arith.constant 16 : i32
    %188 = tpu.dynamic_rotate %184 by %c16_i32_80 dim 1 : vector<8x256xf32>, i32 -> vector<8x256xf32>
    %189 = vector.broadcast %51 : vector<1x256xf32> to vector<8x256xf32>
    %190 = arith.mulf %188, %189 : vector<8x256xf32>
    %c15_i32 = arith.constant 15 : i32
    %191 = tpu.dynamic_rotate %184 by %c15_i32 dim 1 : vector<8x256xf32>, i32 -> vector<8x256xf32>
    %192 = vector.broadcast %72 : vector<1x256xf32> to vector<8x256xf32>
    %193 = arith.mulf %191, %192 : vector<8x256xf32>
    %c1_i32_81 = arith.constant 1 : i32
    %194 = tpu.dynamic_rotate %184 by %c1_i32_81 dim 1 : vector<8x256xf32>, i32 -> vector<8x256xf32>
    %195 = vector.broadcast %93 : vector<1x256xf32> to vector<8x256xf32>
    %196 = arith.mulf %194, %195 : vector<8x256xf32>
    %c255_i32 = arith.constant 255 : i32
    %197 = tpu.dynamic_rotate %184 by %c255_i32 dim 1 : vector<8x256xf32>, i32 -> vector<8x256xf32>
    %198 = vector.broadcast %114 : vector<1x256xf32> to vector<8x256xf32>
    %199 = arith.mulf %197, %198 : vector<8x256xf32>
    %c241_i32 = arith.constant 241 : i32
    %200 = tpu.dynamic_rotate %184 by %c241_i32 dim 1 : vector<8x256xf32>, i32 -> vector<8x256xf32>
    %201 = vector.broadcast %135 : vector<1x256xf32> to vector<8x256xf32>
    %202 = arith.mulf %200, %201 : vector<8x256xf32>
    %c240_i32 = arith.constant 240 : i32
    %203 = tpu.dynamic_rotate %184 by %c240_i32 dim 1 : vector<8x256xf32>, i32 -> vector<8x256xf32>
    %204 = vector.broadcast %156 : vector<1x256xf32> to vector<8x256xf32>
    %205 = arith.mulf %203, %204 : vector<8x256xf32>
    %c239_i32 = arith.constant 239 : i32
    %206 = tpu.dynamic_rotate %184 by %c239_i32 dim 1 : vector<8x256xf32>, i32 -> vector<8x256xf32>
    %207 = vector.broadcast %177 : vector<1x256xf32> to vector<8x256xf32>
    %208 = arith.mulf %206, %207 : vector<8x256xf32>
    %209 = tpu.concatenate %187, %190, %193, %196, %184, %199, %202, %205, %208 in 0 : vector<8x256xf32>, vector<8x256xf32>, vector<8x256xf32>, vector<8x256xf32>, vector<8x256xf32>, vector<8x256xf32>, vector<8x256xf32>, vector<8x256xf32>, vector<8x256xf32> -> vector<72x256xf32>
    %cst_82 = arith.constant dense<0.000000e+00> : vector<8x256xf32>
    %210 = tpu.matmul %1, %209, %cst_82 {dimension_numbers = #tpu.dot_dimension_numbers<[1], [0], [0], [1], [0, 0, 1, 1], [], []>} : vector<8x72xf32>, vector<72x256xf32>, vector<8x256xf32> -> vector<8x256xf32>
    %211 = vector.broadcast %4 : vector<8x1xf32> to vector<8x256xf32>
    %212 = arith.addf %210, %211 : vector<8x256xf32>
    %cst_83 = arith.constant 0.000000e+00 : f32
    %213 = vector.broadcast %cst_83 : f32 to vector<8x256xf32>
    %214 = arith.maximumf %212, %213 : vector<8x256xf32>
    %cst_84 = arith.constant dense<0.000000e+00> : vector<8x256xf32>
    %215 = tpu.matmul %2, %214, %cst_84 {dimension_numbers = #tpu.dot_dimension_numbers<[1], [0], [0], [1], [0, 0, 1, 1], [], []>} : vector<8x8xf32>, vector<8x256xf32>, vector<8x256xf32> -> vector<8x256xf32>
    %216 = vector.broadcast %5 : vector<8x1xf32> to vector<8x256xf32>
    %217 = arith.addf %215, %216 : vector<8x256xf32>
    %cst_85 = arith.constant 0.000000e+00 : f32
    %218 = vector.broadcast %cst_85 : f32 to vector<8x256xf32>
    %219 = arith.maximumf %217, %218 : vector<8x256xf32>
    %220 = arith.addf %219, %179 : vector<8x256xf32>
    %cst_86 = arith.constant 0.000000e+00 : f32
    %221 = vector.broadcast %cst_86 : f32 to vector<8x256xf32>
    %222 = arith.maximumf %220, %221 : vector<8x256xf32>
    %c0_87 = arith.constant 0 : index
    %c0_88 = arith.constant 0 : index
    %c0_89 = arith.constant 0 : index
    %223 = vector.load %arg9[%c0_87, %c0_88, %c0_89] : memref<2x8x256xf32, #tpu.memory_space<vmem>>, vector<1x8x256xf32>
    %224 = vector.shape_cast %223 : vector<1x8x256xf32> to vector<8x256xf32>
    %225 = vector.shape_cast %222 : vector<8x256xf32> to vector<1x8x256xf32>
    tpu.vector_store %arg9[%c0_87, %c0_88, %c0_89], %225 {strides = array<i32>} : memref<2x8x256xf32, #tpu.memory_space<vmem>>, vector<1x8x256xf32>,
    %c1_90 = arith.constant 1 : index
    %c0_91 = arith.constant 0 : index
    %c0_92 = arith.constant 0 : index
    %226 = vector.load %arg1[%c1_90, %c0_91, %c0_92] : memref<2x8x256xf32, #tpu.memory_space<vmem>>, vector<1x8x256xf32>
    %227 = vector.shape_cast %226 : vector<1x8x256xf32> to vector<8x256xf32>
    %cst_93 = arith.constant dense<0.000000e+00> : vector<8x256xf32>
    %228 = tpu.matmul %0, %227, %cst_93 {dimension_numbers = #tpu.dot_dimension_numbers<[1], [0], [0], [1], [0, 0, 1, 1], [], []>} : vector<8x8xf32>, vector<8x256xf32>, vector<8x256xf32> -> vector<8x256xf32>
    %229 = vector.broadcast %3 : vector<8x1xf32> to vector<8x256xf32>
    %230 = arith.addf %228, %229 : vector<8x256xf32>
    %cst_94 = arith.constant 0.000000e+00 : f32
    %231 = vector.broadcast %cst_94 : f32 to vector<8x256xf32>
    %232 = arith.maximumf %230, %231 : vector<8x256xf32>
    %c17_i32_95 = arith.constant 17 : i32
    %233 = tpu.dynamic_rotate %232 by %c17_i32_95 dim 1 : vector<8x256xf32>, i32 -> vector<8x256xf32>
    %234 = vector.broadcast %30 : vector<1x256xf32> to vector<8x256xf32>
    %235 = arith.mulf %233, %234 : vector<8x256xf32>
    %c16_i32_96 = arith.constant 16 : i32
    %236 = tpu.dynamic_rotate %232 by %c16_i32_96 dim 1 : vector<8x256xf32>, i32 -> vector<8x256xf32>
    %237 = vector.broadcast %51 : vector<1x256xf32> to vector<8x256xf32>
    %238 = arith.mulf %236, %237 : vector<8x256xf32>
    %c15_i32_97 = arith.constant 15 : i32
    %239 = tpu.dynamic_rotate %232 by %c15_i32_97 dim 1 : vector<8x256xf32>, i32 -> vector<8x256xf32>
    %240 = vector.broadcast %72 : vector<1x256xf32> to vector<8x256xf32>
    %241 = arith.mulf %239, %240 : vector<8x256xf32>
    %c1_i32_98 = arith.constant 1 : i32
    %242 = tpu.dynamic_rotate %232 by %c1_i32_98 dim 1 : vector<8x256xf32>, i32 -> vector<8x256xf32>
    %243 = vector.broadcast %93 : vector<1x256xf32> to vector<8x256xf32>
    %244 = arith.mulf %242, %243 : vector<8x256xf32>
    %c255_i32_99 = arith.constant 255 : i32
    %245 = tpu.dynamic_rotate %232 by %c255_i32_99 dim 1 : vector<8x256xf32>, i32 -> vector<8x256xf32>
    %246 = vector.broadcast %114 : vector<1x256xf32> to vector<8x256xf32>
    %247 = arith.mulf %245, %246 : vector<8x256xf32>
    %c241_i32_100 = arith.constant 241 : i32
    %248 = tpu.dynamic_rotate %232 by %c241_i32_100 dim 1 : vector<8x256xf32>, i32 -> vector<8x256xf32>
    %249 = vector.broadcast %135 : vector<1x256xf32> to vector<8x256xf32>
    %250 = arith.mulf %248, %249 : vector<8x256xf32>
    %c240_i32_101 = arith.constant 240 : i32
    %251 = tpu.dynamic_rotate %232 by %c240_i32_101 dim 1 : vector<8x256xf32>, i32 -> vector<8x256xf32>
    %252 = vector.broadcast %156 : vector<1x256xf32> to vector<8x256xf32>
    %253 = arith.mulf %251, %252 : vector<8x256xf32>
    %c239_i32_102 = arith.constant 239 : i32
    %254 = tpu.dynamic_rotate %232 by %c239_i32_102 dim 1 : vector<8x256xf32>, i32 -> vector<8x256xf32>
    %255 = vector.broadcast %177 : vector<1x256xf32> to vector<8x256xf32>
    %256 = arith.mulf %254, %255 : vector<8x256xf32>
    %257 = tpu.concatenate %235, %238, %241, %244, %232, %247, %250, %253, %256 in 0 : vector<8x256xf32>, vector<8x256xf32>, vector<8x256xf32>, vector<8x256xf32>, vector<8x256xf32>, vector<8x256xf32>, vector<8x256xf32>, vector<8x256xf32>, vector<8x256xf32> -> vector<72x256xf32>
    %cst_103 = arith.constant dense<0.000000e+00> : vector<8x256xf32>
    %258 = tpu.matmul %1, %257, %cst_103 {dimension_numbers = #tpu.dot_dimension_numbers<[1], [0], [0], [1], [0, 0, 1, 1], [], []>} : vector<8x72xf32>, vector<72x256xf32>, vector<8x256xf32> -> vector<8x256xf32>
    %259 = vector.broadcast %4 : vector<8x1xf32> to vector<8x256xf32>
    %260 = arith.addf %258, %259 : vector<8x256xf32>
    %cst_104 = arith.constant 0.000000e+00 : f32
    %261 = vector.broadcast %cst_104 : f32 to vector<8x256xf32>
    %262 = arith.maximumf %260, %261 : vector<8x256xf32>
    %cst_105 = arith.constant dense<0.000000e+00> : vector<8x256xf32>
    %263 = tpu.matmul %2, %262, %cst_105 {dimension_numbers = #tpu.dot_dimension_numbers<[1], [0], [0], [1], [0, 0, 1, 1], [], []>} : vector<8x8xf32>, vector<8x256xf32>, vector<8x256xf32> -> vector<8x256xf32>
    %264 = vector.broadcast %5 : vector<8x1xf32> to vector<8x256xf32>
    %265 = arith.addf %263, %264 : vector<8x256xf32>
    %cst_106 = arith.constant 0.000000e+00 : f32
    %266 = vector.broadcast %cst_106 : f32 to vector<8x256xf32>
    %267 = arith.maximumf %265, %266 : vector<8x256xf32>
    %268 = arith.addf %267, %227 : vector<8x256xf32>
    %cst_107 = arith.constant 0.000000e+00 : f32
    %269 = vector.broadcast %cst_107 : f32 to vector<8x256xf32>
    %270 = arith.maximumf %268, %269 : vector<8x256xf32>
    %c1_108 = arith.constant 1 : index
    %c0_109 = arith.constant 0 : index
    %c0_110 = arith.constant 0 : index
    %271 = vector.load %arg9[%c1_108, %c0_109, %c0_110] : memref<2x8x256xf32, #tpu.memory_space<vmem>>, vector<1x8x256xf32>
    %272 = vector.shape_cast %271 : vector<1x8x256xf32> to vector<8x256xf32>
    %273 = vector.shape_cast %270 : vector<8x256xf32> to vector<1x8x256xf32>
    tpu.vector_store %arg9[%c1_108, %c0_109, %c0_110], %273 {strides = array<i32>} : memref<2x8x256xf32, #tpu.memory_space<vmem>>, vector<1x8x256xf32>,
    return
  }
  func.func @transform_0(%arg0: i32) -> (i32, i32, i32) {
    %c0_i32 = arith.constant 0 : i32
    %c0_i32_0 = arith.constant 0 : i32
    %c0_i32_1 = arith.constant 0 : i32
    return %arg0, %c0_i32, %c0_i32_0 : i32, i32, i32
  }
  func.func @transform_1(%arg0: i32) -> (i32, i32) {
    %c0_i32 = arith.constant 0 : i32
    %c0_i32_0 = arith.constant 0 : i32
    %c0_i32_1 = arith.constant 0 : i32
    return %c0_i32, %c0_i32_0 : i32, i32
  }
  func.func @transform_2(%arg0: i32) -> (i32, i32) {
    %c0_i32 = arith.constant 0 : i32
    %c0_i32_0 = arith.constant 0 : i32
    %c0_i32_1 = arith.constant 0 : i32
    return %c0_i32, %c0_i32_0 : i32, i32
  }
  func.func @transform_3(%arg0: i32) -> (i32, i32) {
    %c0_i32 = arith.constant 0 : i32
    %c0_i32_0 = arith.constant 0 : i32
    %c0_i32_1 = arith.constant 0 : i32
    return %c0_i32, %c0_i32_0 : i32, i32
  }
  func.func @transform_4(%arg0: i32) -> (i32, i32, i32) {
    %c0_i32 = arith.constant 0 : i32
    %c0_i32_0 = arith.constant 0 : i32
    %c0_i32_1 = arith.constant 0 : i32
    %c0_i32_2 = arith.constant 0 : i32
    return %c0_i32, %c0_i32_0, %c0_i32_1 : i32, i32, i32
  }
  func.func @transform_5(%arg0: i32) -> (i32, i32) {
    %c0_i32 = arith.constant 0 : i32
    %c0_i32_0 = arith.constant 0 : i32
    %c0_i32_1 = arith.constant 0 : i32
    return %c0_i32, %c0_i32_0 : i32, i32
  }
  func.func @transform_6(%arg0: i32) -> (i32, i32) {
    %c0_i32 = arith.constant 0 : i32
    %c0_i32_0 = arith.constant 0 : i32
    %c0_i32_1 = arith.constant 0 : i32
    return %c0_i32, %c0_i32_0 : i32, i32
  }
  func.func @transform_7(%arg0: i32) -> (i32, i32) {
    %c0_i32 = arith.constant 0 : i32
    %c0_i32_0 = arith.constant 0 : i32
    %c0_i32_1 = arith.constant 0 : i32
    return %c0_i32, %c0_i32_0 : i32, i32
  }
  func.func @transform_8(%arg0: i32) -> (i32, i32, i32) {
    %c0_i32 = arith.constant 0 : i32
    %c0_i32_0 = arith.constant 0 : i32
    %c0_i32_1 = arith.constant 0 : i32
    return %arg0, %c0_i32, %c0_i32_0 : i32, i32, i32
  }
}

</mosaic_0001>

<llo_original>
// kernel: tpu_custom_call.1
$region0: #{tpu_custom_call.1}
  #allocation0 [shape = 'u32[]', space=smem, size = 0x4, offset = 0x4, fixed_abs, tag = 'smem constant byte address 0x4 - core index']
  #allocation1 [shape = 'u32[144,128]{1,0:T(1,128)}', space=vmem, size = 0x12000, scoped, tag = 'internal scratch']
  %s0 = inlined_call_operand.hbm [shape: f32[2,8,256], index: 0, kind: input, shape index: {}]
  %s1 = inlined_call_operand.vmem [shape: f32[8,8], index: 1, kind: input, shape index: {}]
  %s2 = inlined_call_operand.vmem [shape: f32[8,72], index: 2, kind: input, shape index: {}]
  %s3 = inlined_call_operand.vmem [shape: f32[8,8], index: 3, kind: input, shape index: {}]
  %s4 = inlined_call_operand.vmem [shape: s32[2,1,256], index: 4, kind: input, shape index: {}]
  %s5 = inlined_call_operand.vmem [shape: f32[8,1], index: 5, kind: input, shape index: {}]
  %s6 = inlined_call_operand.vmem [shape: f32[8,1], index: 6, kind: input, shape index: {}]
  %s7 = inlined_call_operand.vmem [shape: f32[8,1], index: 7, kind: input, shape index: {}]
  %s8 = inlined_call_operand.hbm [shape: f32[2,8,256], index: 8, kind: output, shape index: {}]
  %s9 = sld [smem:[#allocation0]]
  $region46: #{tpu_custom_call.1} parent=0
    _
  %s11 = ssub.s32 1, %s9
  %s12 = scalar_select 0, %s11, %s9
  $region1: #{tpu_custom_call.1} parent=0
    #allocation2 [shape = 'u8[16384]{0}', space=vmem, size = 0x4000, scoped, tag = 'input window, operand 0, single buffered']
    #allocation3 [shape = 's32[1]{0}', space=sflag, size = 0x4, scoped, tag = 'scoped memory for tpu_custom_call.1']
    #allocation4 [shape = 's32[1]{0}', space=sflag, size = 0x4, scoped, tag = 'scoped memory for tpu_custom_call.1']
    #allocation5 [shape = 'u8[16384]{0}', space=vmem, size = 0x4000, scoped, tag = 'output window, operand 0, single buffered']
    %13 = vsyncpa [#allocation3], 0
    %14 = vsyncpa [#allocation4], 0
    // Predicated region
    $region2: #{tpu_custom_call.1} parent=1 // pred_check
      _
    $region3: #{tpu_custom_call.1} parent=1 // pred_check_branch
      %16 = sbr.rel (0) target = $region5
    $region4: #{tpu_custom_call.1} parent=1 // pred_region
      %s18 = ssub.s32 512, 512
      %19 = vsyncadd [#allocation3], %s18
      %s20 = sshll.u32 [#allocation2], 4
      %s21 = int_to_ptr.vmem [resolvable:$true] %s20
      %26 = dma.hbm_to_vmem [thread:$0]  %s0, 512, %s21, [#allocation3], 256, 256, 16
    $region5: #{tpu_custom_call.1} parent=1 // pred_fallthru
      _
    // Predicated region
    $region6: #{tpu_custom_call.1} parent=1 // pred_check
      _
    $region7: #{tpu_custom_call.1} parent=1 // pred_check_branch
      %28 = sbr.rel (0) target = $region9
    $region8: #{tpu_custom_call.1} parent=1 // pred_region
      _
    $region9: #{tpu_custom_call.1} parent=1 // pred_fallthru
      _
    // Predicated region
    $region10: #{tpu_custom_call.1} parent=1 // pred_check
      _
    $region11: #{tpu_custom_call.1} parent=1 // pred_check_branch
      %30 = sbr.rel (0) target = $region13
    $region12: #{tpu_custom_call.1} parent=1 // pred_region
      _
    $region13: #{tpu_custom_call.1} parent=1 // pred_fallthru
      _
    // Predicated region
    $region14: #{tpu_custom_call.1} parent=1 // pred_check
      _
    $region15: #{tpu_custom_call.1} parent=1 // pred_check_branch
      %32 = sbr.rel (0) target = $region17
    $region16: #{tpu_custom_call.1} parent=1 // pred_region
      _
    $region17: #{tpu_custom_call.1} parent=1 // pred_fallthru
      _
    // Predicated region
    $region18: #{tpu_custom_call.1} parent=1 // pred_check
      _
    $region19: #{tpu_custom_call.1} parent=1 // pred_check_branch
      %34 = sbr.rel (0) target = $region21
    $region20: #{tpu_custom_call.1} parent=1 // pred_region
      _
    $region21: #{tpu_custom_call.1} parent=1 // pred_fallthru
      _
    // Predicated region
    $region22: #{tpu_custom_call.1} parent=1 // pred_check
      _
    $region23: #{tpu_custom_call.1} parent=1 // pred_check_branch
      %36 = sbr.rel (0) target = $region25
    $region24: #{tpu_custom_call.1} parent=1 // pred_region
      _
    $region25: #{tpu_custom_call.1} parent=1 // pred_fallthru
      _
    // Predicated region
    $region26: #{tpu_custom_call.1} parent=1 // pred_check
      _
    $region27: #{tpu_custom_call.1} parent=1 // pred_check_branch
      %38 = sbr.rel (0) target = $region29
    $region28: #{tpu_custom_call.1} parent=1 // pred_region
      _
    $region29: #{tpu_custom_call.1} parent=1 // pred_fallthru
      _
    // Predicated region
    $region30: #{tpu_custom_call.1} parent=1 // pred_check
      _
    $region31: #{tpu_custom_call.1} parent=1 // pred_check_branch
      %40 = sbr.rel (0) target = $region33
    $region32: #{tpu_custom_call.1} parent=1 // pred_region
      _
    $region33: #{tpu_custom_call.1} parent=1 // pred_fallthru
      _
    // Predicated region
    $region34: #{tpu_custom_call.1} parent=1 // pred_check
      _
    $region35: #{tpu_custom_call.1} parent=1 // pred_check_branch
      %42 = sbr.rel (0) target = $region37
    $region36: #{tpu_custom_call.1} parent=1 // pred_region
      %43 = dma.done [#allocation3], 512
    $region37: #{tpu_custom_call.1} parent=1 // pred_fallthru
      _
    %v44 = vld [vmem:[%s1] sm:$0xff]
    %v45 = vld [vmem:[%s2] sm:$0xff]
    %v46 = vld [vmem:[%s3] sm:$0xff]
    %v47 = vld [vmem:[%s5] sm:$0xff]
    %v48 = vld [vmem:[%s6] sm:$0xff]
    %v49 = vld [vmem:[%s7] sm:$0xff]
    %v50 = vld [vmem:[%s4] sm:$0x3]
    %s51 = scalar_lea.vmem %s4, 2
    %v52 = vld [vmem:[%s51] sm:$0x3]
    %v53 = vadd.s32 %v50, 4294967295
    %vm54 = vcmp.ge.s32.totalorder %v53, 0
    %vm55 = vcmp.lt.s32.totalorder %v53, 16
    %vm56 = vmand %vm54, %vm55
    %v57 = vadd.s32 %v52, 4294967295
    %vm58 = vcmp.ge.s32.totalorder %v57, 0
    %vm59 = vmand %vm56, %vm58
    %vm60 = vcmp.lt.s32.totalorder %v57, 16
    %vm61 = vmand %vm59, %vm60
    %v62 = vsel %vm61, 1, 0
    %v63 = vcvt.s32.f32 %v62
    %vm64 = vcmp.ge.s32.totalorder %v52, 0
    %vm65 = vmand %vm56, %vm64
    %vm66 = vcmp.lt.s32.totalorder %v52, 16
    %vm67 = vmand %vm65, %vm66
    %v68 = vsel %vm67, 1, 0
    %v69 = vcvt.s32.f32 %v68
    %v70 = vadd.s32 %v52, 1
    %vm71 = vcmp.ge.s32.totalorder %v70, 0
    %vm72 = vmand %vm56, %vm71
    %vm73 = vcmp.lt.s32.totalorder %v70, 16
    %vm74 = vmand %vm72, %vm73
    %v75 = vsel %vm74, 1, 0
    %v76 = vcvt.s32.f32 %v75
    %vm77 = vcmp.ge.s32.totalorder %v50, 0
    %vm78 = vcmp.lt.s32.totalorder %v50, 16
    %vm79 = vmand %vm77, %vm78
    %vm80 = vmand %vm79, %vm58
    %vm81 = vmand %vm80, %vm60
    %v82 = vsel %vm81, 1, 0
    %v83 = vcvt.s32.f32 %v82
    %vm84 = vmand %vm79, %vm71
    %vm85 = vmand %vm84, %vm73
    %v86 = vsel %vm85, 1, 0
    %v87 = vcvt.s32.f32 %v86
    %v88 = vadd.s32 %v50, 1
    %vm89 = vcmp.ge.s32.totalorder %v88, 0
    %vm90 = vcmp.lt.s32.totalorder %v88, 16
    %vm91 = vmand %vm89, %vm90
    %vm92 = vmand %vm91, %vm58
    %vm93 = vmand %vm92, %vm60
    %v94 = vsel %vm93, 1, 0
    %v95 = vcvt.s32.f32 %v94
    %vm96 = vmand %vm91, %vm64
    %vm97 = vmand %vm96, %vm66
    %v98 = vsel %vm97, 1, 0
    %v99 = vcvt.s32.f32 %v98
    %vm100 = vmand %vm91, %vm71
    %vm101 = vmand %vm100, %vm73
    %v102 = vsel %vm101, 1, 0
    %v103 = vcvt.s32.f32 %v102
    %v104 = vld [vmem:[#allocation2] sm:$0xff]
    %v105 = vld [vmem:[#allocation2 + $0x8] sm:$0xff]
    %107 = vset.pattern.permute.xlu0 0
    %108 = vperm.xlu0 %107, %v47
    %v109 = vpop.permute.xlu0 %108
    %vm111 = vcmask 64512
    %v113 = vsel %vm111, %v44, 0
    %115 = vmatprep.subr.mxu0 %v105
    %116 = vmatpush1.msra.mxu0 %v104
    %117 = vmatprep.subr.mxu0 0.0
    %118 = vmatpush1.msra.mxu0 0.0
    %119 = vmatprep.subr.mxu0 0.0
    %120 = vmatpush1.msra.mxu0 0.0
    %121 = vmatprep.subr.mxu0 0.0
    %122 = vmatpush1.msra.mxu0 0.0
    %123 = vmatprep.subr.mxu0 0.0
    %124 = vmatpush1.msra.mxu0 0.0
    %125 = vmatprep.subr.mxu0 0.0
    %126 = vmatpush1.msra.mxu0 0.0
    %127 = vmatprep.subr.mxu0 0.0
    %128 = vmatpush1.msra.mxu0 0.0
    %129 = vmatprep.subr.mxu0 0.0
    %130 = vmatpush1.msra.mxu0 0.0
    %131 = vmatprep.subr.mxu0 0.0
    %132 = vmatpush1.msra.mxu0 0.0
    %133 = vmatprep.subr.mxu0 0.0
    %134 = vmatpush1.msra.mxu0 0.0
    %135 = vmatprep.subr.mxu0 0.0
    %136 = vmatpush1.msra.mxu0 0.0
    %137 = vmatprep.subr.mxu0 0.0
    %138 = vmatpush1.msra.mxu0 0.0
    %139 = vmatprep.subr.mxu0 0.0
    %140 = vmatpush1.msra.mxu0 0.0
    %141 = vmatprep.subr.mxu0 0.0
    %142 = vmatpush1.msra.mxu0 0.0
    %143 = vmatprep.subr.mxu0 0.0
    %144 = vmatpush1.msra.mxu0 0.0
    %145 = vmatprep.subr.mxu0 0.0
    %146 = vmatpush1.msra.mxu0 0.0
    %147 = vmatprep.subr.mxu0 0.0
    %148 = vmatpush1.msra.mxu0 0.0
    %149 = vmatprep.subr.mxu0 0.0
    %150 = vmatpush1.msra.mxu0 0.0
    %151 = vmatprep.subr.mxu0 0.0
    %152 = vmatpush1.msra.mxu0 0.0
    %153 = vmatprep.subr.mxu0 0.0
    %154 = vmatpush1.msra.mxu0 0.0
    %155 = vmatprep.subr.mxu0 0.0
    %156 = vmatpush1.msra.mxu0 0.0
    %157 = vmatprep.subr.mxu0 0.0
    %158 = vmatpush1.msra.mxu0 0.0
    %159 = vmatprep.subr.mxu0 0.0
    %160 = vmatpush1.msra.mxu0 0.0
    %161 = vmatprep.subr.mxu0 0.0
    %162 = vmatpush1.msra.mxu0 0.0
    %163 = vmatprep.subr.mxu0 0.0
    %164 = vmatpush1.msra.mxu0 0.0
    %165 = vmatprep.subr.mxu0 0.0
    %166 = vmatpush1.msra.mxu0 0.0
    %167 = vmatprep.subr.mxu0 0.0
    %168 = vmatpush1.msra.mxu0 0.0
    %169 = vmatprep.subr.mxu0 0.0
    %170 = vmatpush1.msra.mxu0 0.0
    %171 = vmatprep.subr.mxu0 0.0
    %172 = vmatpush1.msra.mxu0 0.0
    %173 = vmatprep.subr.mxu0 0.0
    %174 = vmatpush1.msra.mxu0 0.0
    %175 = vmatprep.subr.mxu0 0.0
    %176 = vmatpush1.msra.mxu0 0.0
    %177 = vmatprep.subr.mxu0 0.0
    %178 = vmatpush1.msra.mxu0 0.0
    %179 = vmatprep.mubr.f32.mxu0 0.0
    %180 = vmatmul.mubr.f32.gmra.mrb[0].mxu0 %v113
    %v181 = vpop.f32.mrb[0].mxu0
    %v182 = vadd.f32 %v109, %v181
    %v183 = vpop.f32.mrb[0].mxu0
    %v184 = vadd.f32 %v109, %v183
    %185 = vdwg.mxu0
    %v186 = vmax.f32 %v182, 0.0
    %v187 = vmax.f32 %v184, 0.0
    %188 = vrot.lane.b32.xlu0 %v186, 17
    %v189 = vpop.permute.xlu0 %188
    %190 = vrot.lane.b32.xlu0 %v187, 17
    %v191 = vpop.permute.xlu0 %190
    %v192 = vlaneseq
    %v193 = vand.u32 %v192, 127
    %vm194 = vcmp.lt.s32.totalorder %v193, 17
    %v195 = vsel %vm194, %v189, %v191
    %v196 = vsel %vm194, %v191, %v189
    %v198 = vlaneseq
    %v199 = vshrl.u32 %v198, 7
    %v200 = vsub.s32 0, %v199
    %v201 = vrot.slane %v63, %v200
    %v202 = vlaneseq
    %v203 = vshrl.u32 %v202, 7
    %v204 = vsub.s32 1, %v203
    %v205 = vrot.slane %v63, %v204
    %v208 = vmul.f32 %v196, %v201
    %v209 = vmul.f32 %v195, %v205
    %210 = vrot.lane.b32.xlu0 %v186, 16
    %v211 = vpop.permute.xlu0 %210
    %212 = vrot.lane.b32.xlu0 %v187, 16
    %v213 = vpop.permute.xlu0 %212
    %vm214 = vcmp.lt.s32.totalorder %v193, 16
    %v215 = vsel %vm214, %v211, %v213
    %v216 = vsel %vm214, %v213, %v211
    %v218 = vlaneseq
    %v219 = vshrl.u32 %v218, 7
    %v220 = vsub.s32 0, %v219
    %v221 = vrot.slane %v69, %v220
    %v222 = vlaneseq
    %v223 = vshrl.u32 %v222, 7
    %v224 = vsub.s32 1, %v223
    %v225 = vrot.slane %v69, %v224
    %v228 = vmul.f32 %v216, %v221
    %v229 = vmul.f32 %v215, %v225
    %230 = vrot.lane.b32.xlu0 %v186, 15
    %v231 = vpop.permute.xlu0 %230
    %232 = vrot.lane.b32.xlu0 %v187, 15
    %v233 = vpop.permute.xlu0 %232
    %vm234 = vcmp.lt.s32.totalorder %v193, 15
    %v235 = vsel %vm234, %v231, %v233
    %v236 = vsel %vm234, %v233, %v231
    %v238 = vlaneseq
    %v239 = vshrl.u32 %v238, 7
    %v240 = vsub.s32 0, %v239
    %v241 = vrot.slane %v76, %v240
    %v242 = vlaneseq
    %v243 = vshrl.u32 %v242, 7
    %v244 = vsub.s32 1, %v243
    %v245 = vrot.slane %v76, %v244
    %v248 = vmul.f32 %v236, %v241
    %v249 = vmul.f32 %v235, %v245
    %250 = vrot.lane.b32.xlu0 %v186, 1
    %v251 = vpop.permute.xlu0 %250
    %252 = vrot.lane.b32.xlu0 %v187, 1
    %v253 = vpop.permute.xlu0 %252
    %vm254 = vcmp.lt.s32.totalorder %v193, 1
    %v255 = vsel %vm254, %v251, %v253
    %v256 = vsel %vm254, %v253, %v251
    %v258 = vlaneseq
    %v259 = vshrl.u32 %v258, 7
    %v260 = vsub.s32 0, %v259
    %v261 = vrot.slane %v83, %v260
    %v262 = vlaneseq
    %v263 = vshrl.u32 %v262, 7
    %v264 = vsub.s32 1, %v263
    %v265 = vrot.slane %v83, %v264
    %v268 = vmul.f32 %v256, %v261
    %v269 = vmul.f32 %v255, %v265
    %270 = vrot.lane.b32.xlu0 %v186, 127
    %v271 = vpop.permute.xlu0 %270
    %272 = vrot.lane.b32.xlu0 %v187, 127
    %v273 = vpop.permute.xlu0 %272
    %vm274 = vcmp.lt.s32.totalorder %v193, 127
    %v275 = vsel %vm274, %v271, %v273
    %v276 = vsel %vm274, %v273, %v271
    %v278 = vlaneseq
    %v279 = vshrl.u32 %v278, 7
    %v280 = vsub.s32 0, %v279
    %v281 = vrot.slane %v87, %v280
    %v282 = vlaneseq
    %v283 = vshrl.u32 %v282, 7
    %v284 = vsub.s32 1, %v283
    %v285 = vrot.slane %v87, %v284
    %v288 = vmul.f32 %v275, %v281
    %v289 = vmul.f32 %v276, %v285
    %290 = vrot.lane.b32.xlu0 %v186, 113
    %v291 = vpop.permute.xlu0 %290
    %292 = vrot.lane.b32.xlu0 %v187, 113
    %v293 = vpop.permute.xlu0 %292
    %vm294 = vcmp.lt.s32.totalorder %v193, 113
    %v295 = vsel %vm294, %v291, %v293
    %v296 = vsel %vm294, %v293, %v291
    %v298 = vlaneseq
    %v299 = vshrl.u32 %v298, 7
    %v300 = vsub.s32 0, %v299
    %v301 = vrot.slane %v95, %v300
    %v302 = vlaneseq
    %v303 = vshrl.u32 %v302, 7
    %v304 = vsub.s32 1, %v303
    %v305 = vrot.slane %v95, %v304
    %v308 = vmul.f32 %v295, %v301
    %v309 = vmul.f32 %v296, %v305
    %310 = vrot.lane.b32.xlu0 %v186, 112
    %v311 = vpop.permute.xlu0 %310
    %312 = vrot.lane.b32.xlu0 %v187, 112
    %v313 = vpop.permute.xlu0 %312
    %vm314 = vcmp.lt.s32.totalorder %v193, 112
    %v315 = vsel %vm314, %v311, %v313
    %v316 = vsel %vm314, %v313, %v311
    %v318 = vlaneseq
    %v319 = vshrl.u32 %v318, 7
    %v320 = vsub.s32 0, %v319
    %v321 = vrot.slane %v99, %v320
    %v322 = vlaneseq
    %v323 = vshrl.u32 %v322, 7
    %v324 = vsub.s32 1, %v323
    %v325 = vrot.slane %v99, %v324
    %v328 = vmul.f32 %v315, %v321
    %v329 = vmul.f32 %v316, %v325
    %330 = vrot.lane.b32.xlu0 %v186, 111
    %v331 = vpop.permute.xlu0 %330
    %332 = vrot.lane.b32.xlu0 %v187, 111
    %v333 = vpop.permute.xlu0 %332
    %vm334 = vcmp.lt.s32.totalorder %v193, 111
    %v335 = vsel %vm334, %v331, %v333
    %v336 = vsel %vm334, %v333, %v331
    %v338 = vlaneseq
    %v339 = vshrl.u32 %v338, 7
    %v340 = vsub.s32 0, %v339
    %v341 = vrot.slane %v103, %v340
    %v342 = vlaneseq
    %v343 = vshrl.u32 %v342, 7
    %v344 = vsub.s32 1, %v343
    %v345 = vrot.slane %v103, %v344
    %v348 = vmul.f32 %v335, %v341
    %v349 = vmul.f32 %v336, %v345
    %351 = vset.pattern.permute.xlu0 0
    %352 = vperm.xlu0 %351, %v48
    %v353 = vpop.permute.xlu0 %352
    %vm355 = vcmask 588800
    %v357 = vsel %vm355, %v45, 0
    %359 = vmatprep.subr.mxu0 %v209
    %360 = vmatpush1.msra.mxu0 %v208
    %361 = vmatprep.subr.mxu0 %v229
    %362 = vmatpush1.msra.mxu0 %v228
    %363 = vmatprep.subr.mxu0 %v249
    %364 = vmatpush1.msra.mxu0 %v248
    %365 = vmatprep.subr.mxu0 %v269
    %366 = vmatpush1.msra.mxu0 %v268
    %367 = vmatprep.subr.mxu0 %v187
    %368 = vmatpush1.msra.mxu0 %v186
    %369 = vmatprep.subr.mxu0 %v289
    %370 = vmatpush1.msra.mxu0 %v288
    %371 = vmatprep.subr.mxu0 %v309
    %372 = vmatpush1.msra.mxu0 %v308
    %373 = vmatprep.subr.mxu0 %v329
    %374 = vmatpush1.msra.mxu0 %v328
    %375 = vmatprep.subr.mxu0 %v349
    %376 = vmatpush1.msra.mxu0 %v348
    %377 = vmatprep.subr.mxu0 0.0
    %378 = vmatpush1.msra.mxu0 0.0
    %379 = vmatprep.subr.mxu0 0.0
    %380 = vmatpush1.msra.mxu0 0.0
    %381 = vmatprep.subr.mxu0 0.0
    %382 = vmatpush1.msra.mxu0 0.0
    %383 = vmatprep.subr.mxu0 0.0
    %384 = vmatpush1.msra.mxu0 0.0
    %385 = vmatprep.subr.mxu0 0.0
    %386 = vmatpush1.msra.mxu0 0.0
    %387 = vmatprep.subr.mxu0 0.0
    %388 = vmatpush1.msra.mxu0 0.0
    %389 = vmatprep.subr.mxu0 0.0
    %390 = vmatpush1.msra.mxu0 0.0
    %391 = vmatprep.subr.mxu0 0.0
    %392 = vmatpush1.msra.mxu0 0.0
    %393 = vmatprep.subr.mxu0 0.0
    %394 = vmatpush1.msra.mxu0 0.0
    %395 = vmatprep.subr.mxu0 0.0
    %396 = vmatpush1.msra.mxu0 0.0
    %397 = vmatprep.subr.mxu0 0.0
    %398 = vmatpush1.msra.mxu0 0.0
    %399 = vmatprep.subr.mxu0 0.0
    %400 = vmatpush1.msra.mxu0 0.0
    %401 = vmatprep.subr.mxu0 0.0
    %402 = vmatpush1.msra.mxu0 0.0
    %403 = vmatprep.subr.mxu0 0.0
    %404 = vmatpush1.msra.mxu0 0.0
    %405 = vmatprep.subr.mxu0 0.0
    %406 = vmatpush1.msra.mxu0 0.0
    %407 = vmatprep.subr.mxu0 0.0
    %408 = vmatpush1.msra.mxu0 0.0
    %409 = vmatprep.subr.mxu0 0.0
    %410 = vmatpush1.msra.mxu0 0.0
    %411 = vmatprep.subr.mxu0 0.0
    %412 = vmatpush1.msra.mxu0 0.0
    %413 = vmatprep.subr.mxu0 0.0
    %414 = vmatpush1.msra.mxu0 0.0
    %415 = vmatprep.subr.mxu0 0.0
    %416 = vmatpush1.msra.mxu0 0.0
    %417 = vmatprep.subr.mxu0 0.0
    %418 = vmatpush1.msra.mxu0 0.0
    %419 = vmatprep.subr.mxu0 0.0
    %420 = vmatpush1.msra.mxu0 0.0
    %421 = vmatprep.subr.mxu0 0.0
    %422 = vmatpush1.msra.mxu0 0.0
    %423 = vmatprep.mubr.f32.mxu0 0.0
    %424 = vmatmul.mubr.f32.gmra.mrb[0].mxu0 %v357
    %v425 = vpop.f32.mrb[0].mxu0
    %v426 = vadd.f32 %v353, %v425
    %v427 = vpop.f32.mrb[0].mxu0
    %v428 = vadd.f32 %v353, %v427
    %429 = vdwg.mxu0
    %v430 = vmax.f32 %v426, 0.0
    %v431 = vmax.f32 %v428, 0.0
    %433 = vset.pattern.permute.xlu0 0
    %434 = vperm.xlu0 %433, %v49
    %v435 = vpop.permute.xlu0 %434
    %v438 = vsel %vm111, %v46, 0
    %440 = vmatprep.subr.mxu0 %v431
    %441 = vmatpush1.msra.mxu0 %v430
    %442 = vmatprep.subr.mxu0 0.0
    %443 = vmatpush1.msra.mxu0 0.0
    %444 = vmatprep.subr.mxu0 0.0
    %445 = vmatpush1.msra.mxu0 0.0
    %446 = vmatprep.subr.mxu0 0.0
    %447 = vmatpush1.msra.mxu0 0.0
    %448 = vmatprep.subr.mxu0 0.0
    %449 = vmatpush1.msra.mxu0 0.0
    %450 = vmatprep.subr.mxu0 0.0
    %451 = vmatpush1.msra.mxu0 0.0
    %452 = vmatprep.subr.mxu0 0.0
    %453 = vmatpush1.msra.mxu0 0.0
    %454 = vmatprep.subr.mxu0 0.0
    %455 = vmatpush1.msra.mxu0 0.0
    %456 = vmatprep.subr.mxu0 0.0
    %457 = vmatpush1.msra.mxu0 0.0
    %458 = vmatprep.subr.mxu0 0.0
    %459 = vmatpush1.msra.mxu0 0.0
    %460 = vmatprep.subr.mxu0 0.0
    %461 = vmatpush1.msra.mxu0 0.0
    %462 = vmatprep.subr.mxu0 0.0
    %463 = vmatpush1.msra.mxu0 0.0
    %464 = vmatprep.subr.mxu0 0.0
    %465 = vmatpush1.msra.mxu0 0.0
    %466 = vmatprep.subr.mxu0 0.0
    %467 = vmatpush1.msra.mxu0 0.0
    %468 = vmatprep.subr.mxu0 0.0
    %469 = vmatpush1.msra.mxu0 0.0
    %470 = vmatprep.subr.mxu0 0.0
    %471 = vmatpush1.msra.mxu0 0.0
    %472 = vmatprep.subr.mxu0 0.0
    %473 = vmatpush1.msra.mxu0 0.0
    %474 = vmatprep.subr.mxu0 0.0
    %475 = vmatpush1.msra.mxu0 0.0
    %476 = vmatprep.subr.mxu0 0.0
    %477 = vmatpush1.msra.mxu0 0.0
    %478 = vmatprep.subr.mxu0 0.0
    %479 = vmatpush1.msra.mxu0 0.0
    %480 = vmatprep.subr.mxu0 0.0
    %481 = vmatpush1.msra.mxu0 0.0
    %482 = vmatprep.subr.mxu0 0.0
    %483 = vmatpush1.msra.mxu0 0.0
    %484 = vmatprep.subr.mxu0 0.0
    %485 = vmatpush1.msra.mxu0 0.0
    %486 = vmatprep.subr.mxu0 0.0
    %487 = vmatpush1.msra.mxu0 0.0
    %488 = vmatprep.subr.mxu0 0.0
    %489 = vmatpush1.msra.mxu0 0.0
    %490 = vmatprep.subr.mxu0 0.0
    %491 = vmatpush1.msra.mxu0 0.0
    %492 = vmatprep.subr.mxu0 0.0
    %493 = vmatpush1.msra.mxu0 0.0
    %494 = vmatprep.subr.mxu0 0.0
    %495 = vmatpush1.msra.mxu0 0.0
    %496 = vmatprep.subr.mxu0 0.0
    %497 = vmatpush1.msra.mxu0 0.0
    %498 = vmatprep.subr.mxu0 0.0
    %499 = vmatpush1.msra.mxu0 0.0
    %500 = vmatprep.subr.mxu0 0.0
    %501 = vmatpush1.msra.mxu0 0.0
    %502 = vmatprep.subr.mxu0 0.0
    %503 = vmatpush1.msra.mxu0 0.0
    %504 = vmatprep.mubr.f32.mxu0 0.0
    %505 = vmatmul.mubr.f32.gmra.mrb[0].mxu0 %v438
    %v506 = vpop.f32.mrb[0].mxu0
    %v507 = vadd.f32 %v435, %v506
    %v508 = vpop.f32.mrb[0].mxu0
    %v509 = vadd.f32 %v435, %v508
    %510 = vdwg.mxu0
    %v511 = vmax.f32 %v507, 0.0
    %v512 = vmax.f32 %v509, 0.0
    %v513 = vadd.f32 %v511, %v104
    %v514 = vadd.f32 %v512, %v105
    %v515 = vmax.f32 %v513, 0.0
    %v516 = vmax.f32 %v514, 0.0
    %517 = vst [vmem:[#allocation5] sm:$0xff] %v515
    %518 = vst [vmem:[#allocation5 + $0x8] sm:$0xff] %v516
    %s519 = scalar_lea.vmem [#allocation2], 16
    %v520 = vld [vmem:[%s519] sm:$0xff]
    %v521 = vld [vmem:[%s519 + $0x8] sm:$0xff]
    %522 = vmatprep.subr.mxu0 %v521
    %523 = vmatpush1.msra.mxu0 %v520
    %524 = vmatprep.subr.mxu0 0.0
    %525 = vmatpush1.msra.mxu0 0.0
    %526 = vmatprep.subr.mxu0 0.0
    %527 = vmatpush1.msra.mxu0 0.0
    %528 = vmatprep.subr.mxu0 0.0
    %529 = vmatpush1.msra.mxu0 0.0
    %530 = vmatprep.subr.mxu0 0.0
    %531 = vmatpush1.msra.mxu0 0.0
    %532 = vmatprep.subr.mxu0 0.0
    %533 = vmatpush1.msra.mxu0 0.0
    %534 = vmatprep.subr.mxu0 0.0
    %535 = vmatpush1.msra.mxu0 0.0
    %536 = vmatprep.subr.mxu0 0.0
    %537 = vmatpush1.msra.mxu0 0.0
    %538 = vmatprep.subr.mxu0 0.0
    %539 = vmatpush1.msra.mxu0 0.0
    %540 = vmatprep.subr.mxu0 0.0
    %541 = vmatpush1.msra.mxu0 0.0
    %542 = vmatprep.subr.mxu0 0.0
    %543 = vmatpush1.msra.mxu0 0.0
    %544 = vmatprep.subr.mxu0 0.0
    %545 = vmatpush1.msra.mxu0 0.0
    %546 = vmatprep.subr.mxu0 0.0
    %547 = vmatpush1.msra.mxu0 0.0
    %548 = vmatprep.subr.mxu0 0.0
    %549 = vmatpush1.msra.mxu0 0.0
    %550 = vmatprep.subr.mxu0 0.0
    %551 = vmatpush1.msra.mxu0 0.0
    %552 = vmatprep.subr.mxu0 0.0
    %553 = vmatpush1.msra.mxu0 0.0
    %554 = vmatprep.subr.mxu0 0.0
    %555 = vmatpush1.msra.mxu0 0.0
    %556 = vmatprep.subr.mxu0 0.0
    %557 = vmatpush1.msra.mxu0 0.0
    %558 = vmatprep.subr.mxu0 0.0
    %559 = vmatpush1.msra.mxu0 0.0
    %560 = vmatprep.subr.mxu0 0.0
    %561 = vmatpush1.msra.mxu0 0.0
    %562 = vmatprep.subr.mxu0 0.0
    %563 = vmatpush1.msra.mxu0 0.0
    %564 = vmatprep.subr.mxu0 0.0
    %565 = vmatpush1.msra.mxu0 0.0
    %566 = vmatprep.subr.mxu0 0.0
    %567 = vmatpush1.msra.mxu0 0.0
    %568 = vmatprep.subr.mxu0 0.0
    %569 = vmatpush1.msra.mxu0 0.0
    %570 = vmatprep.subr.mxu0 0.0
    %571 = vmatpush1.msra.mxu0 0.0
    %572 = vmatprep.subr.mxu0 0.0
    %573 = vmatpush1.msra.mxu0 0.0
    %574 = vmatprep.subr.mxu0 0.0
    %575 = vmatpush1.msra.mxu0 0.0
    %576 = vmatprep.subr.mxu0 0.0
    %577 = vmatpush1.msra.mxu0 0.0
    %578 = vmatprep.subr.mxu0 0.0
    %579 = vmatpush1.msra.mxu0 0.0
    %580 = vmatprep.subr.mxu0 0.0
    %581 = vmatpush1.msra.mxu0 0.0
    %582 = vmatprep.subr.mxu0 0.0
    %583 = vmatpush1.msra.mxu0 0.0
    %584 = vmatprep.subr.mxu0 0.0
    %585 = vmatpush1.msra.mxu0 0.0
    %586 = vmatprep.mubr.f32.mxu0 0.0
    %587 = vmatmul.mubr.f32.gmra.mrb[0].mxu0 %v113
    %v588 = vpop.f32.mrb[0].mxu0
    %v589 = vadd.f32 %v109, %v588
    %v590 = vpop.f32.mrb[0].mxu0
    %v591 = vadd.f32 %v109, %v590
    %592 = vdwg.mxu0
    %v593 = vmax.f32 %v589, 0.0
    %v594 = vmax.f32 %v591, 0.0
    %595 = vrot.lane.b32.xlu0 %v593, 17
    %v596 = vpop.permute.xlu0 %595
    %597 = vrot.lane.b32.xlu0 %v594, 17
    %v598 = vpop.permute.xlu0 %597
    %v599 = vsel %vm194, %v596, %v598
    %v600 = vsel %vm194, %v598, %v596
    %v601 = vmul.f32 %v600, %v201
    %v602 = vmul.f32 %v599, %v205
    %603 = vrot.lane.b32.xlu0 %v593, 16
    %v604 = vpop.permute.xlu0 %603
    %605 = vrot.lane.b32.xlu0 %v594, 16
    %v606 = vpop.permute.xlu0 %605
    %v607 = vsel %vm214, %v604, %v606
    %v608 = vsel %vm214, %v606, %v604
    %v609 = vmul.f32 %v608, %v221
    %v610 = vmul.f32 %v607, %v225
    %611 = vrot.lane.b32.xlu0 %v593, 15
    %v612 = vpop.permute.xlu0 %611
    %613 = vrot.lane.b32.xlu0 %v594, 15
    %v614 = vpop.permute.xlu0 %613
    %v615 = vsel %vm234, %v612, %v614
    %v616 = vsel %vm234, %v614, %v612
    %v617 = vmul.f32 %v616, %v241
    %v618 = vmul.f32 %v615, %v245
    %619 = vrot.lane.b32.xlu0 %v593, 1
    %v620 = vpop.permute.xlu0 %619
    %621 = vrot.lane.b32.xlu0 %v594, 1
    %v622 = vpop.permute.xlu0 %621
    %v623 = vsel %vm254, %v620, %v622
    %v624 = vsel %vm254, %v622, %v620
    %v625 = vmul.f32 %v624, %v261
    %v626 = vmul.f32 %v623, %v265
    %627 = vrot.lane.b32.xlu0 %v593, 127
    %v628 = vpop.permute.xlu0 %627
    %629 = vrot.lane.b32.xlu0 %v594, 127
    %v630 = vpop.permute.xlu0 %629
    %v631 = vsel %vm274, %v628, %v630
    %v632 = vsel %vm274, %v630, %v628
    %v633 = vmul.f32 %v631, %v281
    %v634 = vmul.f32 %v632, %v285
    %635 = vrot.lane.b32.xlu0 %v593, 113
    %v636 = vpop.permute.xlu0 %635
    %637 = vrot.lane.b32.xlu0 %v594, 113
    %v638 = vpop.permute.xlu0 %637
    %v639 = vsel %vm294, %v636, %v638
    %v640 = vsel %vm294, %v638, %v636
    %v641 = vmul.f32 %v639, %v301
    %v642 = vmul.f32 %v640, %v305
    %643 = vrot.lane.b32.xlu0 %v593, 112
    %v644 = vpop.permute.xlu0 %643
    %645 = vrot.lane.b32.xlu0 %v594, 112
    %v646 = vpop.permute.xlu0 %645
    %v647 = vsel %vm314, %v644, %v646
    %v648 = vsel %vm314, %v646, %v644
    %v649 = vmul.f32 %v647, %v321
    %v650 = vmul.f32 %v648, %v325
    %651 = vrot.lane.b32.xlu0 %v593, 111
    %v652 = vpop.permute.xlu0 %651
    %653 = vrot.lane.b32.xlu0 %v594, 111
    %v654 = vpop.permute.xlu0 %653
    %v655 = vsel %vm334, %v652, %v654
    %v656 = vsel %vm334, %v654, %v652
    %v657 = vmul.f32 %v655, %v341
    %v658 = vmul.f32 %v656, %v345
    %659 = vmatprep.subr.mxu0 %v602
    %660 = vmatpush1.msra.mxu0 %v601
    %661 = vmatprep.subr.mxu0 %v610
    %662 = vmatpush1.msra.mxu0 %v609
    %663 = vmatprep.subr.mxu0 %v618
    %664 = vmatpush1.msra.mxu0 %v617
    %665 = vmatprep.subr.mxu0 %v626
    %666 = vmatpush1.msra.mxu0 %v625
    %667 = vmatprep.subr.mxu0 %v594
    %668 = vmatpush1.msra.mxu0 %v593
    %669 = vmatprep.subr.mxu0 %v634
    %670 = vmatpush1.msra.mxu0 %v633
    %671 = vmatprep.subr.mxu0 %v642
    %672 = vmatpush1.msra.mxu0 %v641
    %673 = vmatprep.subr.mxu0 %v650
    %674 = vmatpush1.msra.mxu0 %v649
    %675 = vmatprep.subr.mxu0 %v658
    %676 = vmatpush1.msra.mxu0 %v657
    %677 = vmatprep.subr.mxu0 0.0
    %678 = vmatpush1.msra.mxu0 0.0
    %679 = vmatprep.subr.mxu0 0.0
    %680 = vmatpush1.msra.mxu0 0.0
    %681 = vmatprep.subr.mxu0 0.0
    %682 = vmatpush1.msra.mxu0 0.0
    %683 = vmatprep.subr.mxu0 0.0
    %684 = vmatpush1.msra.mxu0 0.0
    %685 = vmatprep.subr.mxu0 0.0
    %686 = vmatpush1.msra.mxu0 0.0
    %687 = vmatprep.subr.mxu0 0.0
    %688 = vmatpush1.msra.mxu0 0.0
    %689 = vmatprep.subr.mxu0 0.0
    %690 = vmatpush1.msra.mxu0 0.0
    %691 = vmatprep.subr.mxu0 0.0
    %692 = vmatpush1.msra.mxu0 0.0
    %693 = vmatprep.subr.mxu0 0.0
    %694 = vmatpush1.msra.mxu0 0.0
    %695 = vmatprep.subr.mxu0 0.0
    %696 = vmatpush1.msra.mxu0 0.0
    %697 = vmatprep.subr.mxu0 0.0
    %698 = vmatpush1.msra.mxu0 0.0
    %699 = vmatprep.subr.mxu0 0.0
    %700 = vmatpush1.msra.mxu0 0.0
    %701 = vmatprep.subr.mxu0 0.0
    %702 = vmatpush1.msra.mxu0 0.0
    %703 = vmatprep.subr.mxu0 0.0
    %704 = vmatpush1.msra.mxu0 0.0
    %705 = vmatprep.subr.mxu0 0.0
    %706 = vmatpush1.msra.mxu0 0.0
    %707 = vmatprep.subr.mxu0 0.0
    %708 = vmatpush1.msra.mxu0 0.0
    %709 = vmatprep.subr.mxu0 0.0
    %710 = vmatpush1.msra.mxu0 0.0
    %711 = vmatprep.subr.mxu0 0.0
    %712 = vmatpush1.msra.mxu0 0.0
    %713 = vmatprep.subr.mxu0 0.0
    %714 = vmatpush1.msra.mxu0 0.0
    %715 = vmatprep.subr.mxu0 0.0
    %716 = vmatpush1.msra.mxu0 0.0
    %717 = vmatprep.subr.mxu0 0.0
    %718 = vmatpush1.msra.mxu0 0.0
    %719 = vmatprep.subr.mxu0 0.0
    %720 = vmatpush1.msra.mxu0 0.0
    %721 = vmatprep.subr.mxu0 0.0
    %722 = vmatpush1.msra.mxu0 0.0
    %723 = vmatprep.mubr.f32.mxu0 0.0
    %724 = vmatmul.mubr.f32.gmra.mrb[0].mxu0 %v357
    %v725 = vpop.f32.mrb[0].mxu0
    %v726 = vadd.f32 %v353, %v725
    %v727 = vpop.f32.mrb[0].mxu0
    %v728 = vadd.f32 %v353, %v727
    %729 = vdwg.mxu0
    %v730 = vmax.f32 %v726, 0.0
    %v731 = vmax.f32 %v728, 0.0
    %732 = vmatprep.subr.mxu0 %v731
    %733 = vmatpush1.msra.mxu0 %v730
    %734 = vmatprep.subr.mxu0 0.0
    %735 = vmatpush1.msra.mxu0 0.0
    %736 = vmatprep.subr.mxu0 0.0
    %737 = vmatpush1.msra.mxu0 0.0
    %738 = vmatprep.subr.mxu0 0.0
    %739 = vmatpush1.msra.mxu0 0.0
    %740 = vmatprep.subr.mxu0 0.0
    %741 = vmatpush1.msra.mxu0 0.0
    %742 = vmatprep.subr.mxu0 0.0
    %743 = vmatpush1.msra.mxu0 0.0
    %744 = vmatprep.subr.mxu0 0.0
    %745 = vmatpush1.msra.mxu0 0.0
    %746 = vmatprep.subr.mxu0 0.0
    %747 = vmatpush1.msra.mxu0 0.0
    %748 = vmatprep.subr.mxu0 0.0
    %749 = vmatpush1.msra.mxu0 0.0
    %750 = vmatprep.subr.mxu0 0.0
    %751 = vmatpush1.msra.mxu0 0.0
    %752 = vmatprep.subr.mxu0 0.0
    %753 = vmatpush1.msra.mxu0 0.0
    %754 = vmatprep.subr.mxu0 0.0
    %755 = vmatpush1.msra.mxu0 0.0
    %756 = vmatprep.subr.mxu0 0.0
    %757 = vmatpush1.msra.mxu0 0.0
    %758 = vmatprep.subr.mxu0 0.0
    %759 = vmatpush1.msra.mxu0 0.0
    %760 = vmatprep.subr.mxu0 0.0
    %761 = vmatpush1.msra.mxu0 0.0
    %762 = vmatprep.subr.mxu0 0.0
    %763 = vmatpush1.msra.mxu0 0.0
    %764 = vmatprep.subr.mxu0 0.0
    %765 = vmatpush1.msra.mxu0 0.0
    %766 = vmatprep.subr.mxu0 0.0
    %767 = vmatpush1.msra.mxu0 0.0
    %768 = vmatprep.subr.mxu0 0.0
    %769 = vmatpush1.msra.mxu0 0.0
    %770 = vmatprep.subr.mxu0 0.0
    %771 = vmatpush1.msra.mxu0 0.0
    %772 = vmatprep.subr.mxu0 0.0
    %773 = vmatpush1.msra.mxu0 0.0
    %774 = vmatprep.subr.mxu0 0.0
    %775 = vmatpush1.msra.mxu0 0.0
    %776 = vmatprep.subr.mxu0 0.0
    %777 = vmatpush1.msra.mxu0 0.0
    %778 = vmatprep.subr.mxu0 0.0
    %779 = vmatpush1.msra.mxu0 0.0
    %780 = vmatprep.subr.mxu0 0.0
    %781 = vmatpush1.msra.mxu0 0.0
    %782 = vmatprep.subr.mxu0 0.0
    %783 = vmatpush1.msra.mxu0 0.0
    %784 = vmatprep.subr.mxu0 0.0
    %785 = vmatpush1.msra.mxu0 0.0
    %786 = vmatprep.subr.mxu0 0.0
    %787 = vmatpush1.msra.mxu0 0.0
    %788 = vmatprep.subr.mxu0 0.0
    %789 = vmatpush1.msra.mxu0 0.0
    %790 = vmatprep.subr.mxu0 0.0
    %791 = vmatpush1.msra.mxu0 0.0
    %792 = vmatprep.subr.mxu0 0.0
    %793 = vmatpush1.msra.mxu0 0.0
    %794 = vmatprep.subr.mxu0 0.0
    %795 = vmatpush1.msra.mxu0 0.0
    %796 = vmatprep.mubr.f32.mxu0 0.0
    %797 = vmatmul.mubr.f32.gmra.mrb[0].mxu0 %v438
    %v798 = vpop.f32.mrb[0].mxu0
    %v799 = vadd.f32 %v435, %v798
    %v800 = vpop.f32.mrb[0].mxu0
    %v801 = vadd.f32 %v435, %v800
    %802 = vdwg.mxu0
    %v803 = vmax.f32 %v799, 0.0
    %v804 = vmax.f32 %v801, 0.0
    %v805 = vadd.f32 %v803, %v520
    %v806 = vadd.f32 %v804, %v521
    %v807 = vmax.f32 %v805, 0.0
    %v808 = vmax.f32 %v806, 0.0
    %s809 = scalar_lea.vmem [#allocation5], 16
    %810 = vst [vmem:[%s809] sm:$0xff] %v807
    %811 = vst [vmem:[%s809 + $0x8] sm:$0xff] %v808
    // Predicated region
    $region38: #{tpu_custom_call.1} parent=1 // pred_check
      _
    $region39: #{tpu_custom_call.1} parent=1 // pred_check_branch
      %813 = sbr.rel (0) target = $region41
    $region40: #{tpu_custom_call.1} parent=1 // pred_region
      %s815 = ssub.s32 512, 512
      %816 = vsyncadd [#allocation4], %s815
      %s817 = sshll.u32 [#allocation5], 4
      %s818 = int_to_ptr.vmem [resolvable:$true] %s817
      %823 = dma.vmem_to_hbm [thread:$0]  %s818, 512, %s8, [#allocation4], 256, 256, 16
    $region41: #{tpu_custom_call.1} parent=1 // pred_fallthru
      _
    // Predicated region
    $region42: #{tpu_custom_call.1} parent=1 // pred_check
      _
    $region43: #{tpu_custom_call.1} parent=1 // pred_check_branch
      %825 = sbr.rel (0) target = $region45
    $region44: #{tpu_custom_call.1} parent=1 // pred_region
      %826 = dma.done [#allocation4], 512
    $region45: #{tpu_custom_call.1} parent=1 // pred_fallthru
      _
    %827 = vsyncpa [#allocation3], 1
    %828 = vsyncpa [#allocation4], 1

</llo_original>
